<compile_context>
chip_gen: v7x
topology: tpu7x:2x2x1
jax: 0.10.0
libtpu: 0.0.40
codegen_flags: <defaults>
</compile_context>

<pallas_src>
import jax
import jax.numpy as jnp
from jax.experimental import pallas as pl
from jax.experimental.pallas import tpu as pltpu


LANE = 128     # all feature dims padded to multiples of this (lane-dense, MXU tiles)
TILE_N = 256   # node rows per output tile
TILE_E = 512   # edges per chunk


def _round_up(x, m):
    return ((x + m - 1) // m) * m


def _pad2d(x, rows, cols, dtype):
    r, c = x.shape
    return jnp.pad(x.astype(jnp.float32), ((0, rows - r), (0, cols - c))).astype(dtype)


# --------------------------------------------------------------------------
# Kernel 0: hoisted node_transform (once per node, node-tiled, "parallel")
# --------------------------------------------------------------------------
def _node_embed_kernel(nf_ref, wn_ref, bn_ref, emb_ref):
    emb_ref[...] = (jnp.dot(nf_ref[...], wn_ref[...],
                            preferred_element_type=jnp.float32)
                    + bn_ref[...]).astype(emb_ref.dtype)


# --------------------------------------------------------------------------
# Kernel 1 (fused): message MLP + sorted-CSR segment reduction + update MLP
# Grid: (node_tile i  [parallel],  incident edge chunk j  [arbitrary])
# --------------------------------------------------------------------------
def _message_agg_update_kernel(
        cstart_ref, nchunk_ref,                           # scalar prefetch (SMEM)
        semb_ref, ef_ref, dst_ref, nf_ref,                # tiled inputs
        we_ref, be_ref, wm1a_ref, wm1b_ref, bm1_ref, wm2_ref, bm2_ref,
        wu1a_ref, wu1b_ref, bu1_ref, wu2_ref, bu2_ref,
        out_ref,                                          # (TILE_N, od_p) f32
        acc_ref):                                         # VMEM scratch accumulator
    i = pl.program_id(0)          # node tile
    j = pl.program_id(1)          # edge chunk index within this tile's CSR range
    nc = nchunk_ref[i]            # number of real chunks for this node tile

    @pl.when(j == 0)
    def _init():
        acc_ref[...] = jnp.zeros_like(acc_ref)

    @pl.when(j < nc)
    def _accumulate():
        # edge_transform (per edge; bf16 operands, f32 accumulation)
        edge_emb = (jnp.dot(ef_ref[...], we_ref[...],
                            preferred_element_type=jnp.float32) + be_ref[...])
        # message_mlp: Linear(2H -> H) split at the concat boundary, ReLU, Linear(H -> out)
        h = (jnp.dot(semb_ref[...], wm1a_ref[...], preferred_element_type=jnp.float32)
             + jnp.dot(edge_emb.astype(jnp.bfloat16), wm1b_ref[...],
                       preferred_element_type=jnp.float32)
             + bm1_ref[...])
        h = jnp.maximum(h, 0.0)
        msgs = (jnp.dot(h.astype(jnp.bfloat16), wm2_ref[...],
                        preferred_element_type=jnp.float32) + bm2_ref[...])

        # Vectorized segment-sum (replaces per-edge RMW scatter): tile-local
        # one-hot (TILE_N, TILE_E) @ messages (TILE_E, od_p) on the MXU.
        # Edges whose dst lies outside this node tile contribute zero rows.
        rows = (jax.lax.broadcasted_iota(jnp.int32, (TILE_N, TILE_E), 0)
                + i * TILE_N)
        onehot = (rows == dst_ref[0:1, :]).astype(jnp.bfloat16)
        acc_ref[...] += jnp.dot(onehot, msgs.astype(jnp.bfloat16),
                                preferred_element_type=jnp.float32)

    # Finalize once per node tile (also runs when the tile has no incident edges).
    @pl.when(j == jnp.maximum(nc, 1) - 1)
    def _finalize():
        agg = acc_ref[...].astype(jnp.bfloat16)
        u = (jnp.dot(nf_ref[...], wu1a_ref[...], preferred_element_type=jnp.float32)
             + jnp.dot(agg, wu1b_ref[...], preferred_element_type=jnp.float32)
             + bu1_ref[...])
        u = jnp.maximum(u, 0.0)
        out_ref[...] = (jnp.dot(u.astype(jnp.bfloat16), wu2_ref[...],
                                preferred_element_type=jnp.float32) + bu2_ref[...])


# --------------------------------------------------------------------------
# Wrapper
# --------------------------------------------------------------------------
def graph_conv_layer(node_features, edge_indices, edge_features, params):
    n_nodes, node_dim = node_features.shape
    n_edges, edge_dim = edge_features.shape
    hidden_dim = params["wn"].shape[1]
    out_dim = params["wu2"].shape[1]

    bf16, f32 = jnp.bfloat16, jnp.float32

    nd_p = _round_up(node_dim, LANE)
    ed_p = _round_up(edge_dim, LANE)
    hd_p = _round_up(hidden_dim, LANE)
    od_p = _round_up(out_dim, LANE)

    # "+1" guarantees a dummy pad row (row index n_nodes) that absorbs the
    # bias-only messages produced by padded edges; it is sliced off at the end.
    # Do NOT remove the +1 or change dummy_dst.
    n_p = _round_up(n_nodes + 1, TILE_N)
    e_p = _round_up(max(n_edges, 1), TILE_E)
    n_node_tiles = n_p // TILE_N
    n_chunks = e_p // TILE_E

    # Lane-dense, exact zero padding; MXU operands in bf16, biases f32.
    nf_p = _pad2d(node_features, n_p, nd_p, bf16)
    wn = _pad2d(params["wn"], nd_p, hd_p, bf16)
    bn = _pad2d(params["bn"], 1, hd_p, f32)
    we = _pad2d(params["we"], ed_p, hd_p, bf16)
    be = _pad2d(params["be"], 1, hd_p, f32)
    wm1a = _pad2d(params["wm1a"], hd_p, hd_p, bf16)
    wm1b = _pad2d(params["wm1b"], hd_p, hd_p, bf16)
    bm1 = _pad2d(params["bm1"], 1, hd_p, f32)
    wm2 = _pad2d(params["wm2"], hd_p, od_p, bf16)
    bm2 = _pad2d(params["bm2"], 1, od_p, f32)
    wu1a = _pad2d(params["wu1a"], nd_p, hd_p, bf16)
    wu1b = _pad2d(params["wu1b"], od_p, hd_p, bf16)
    bu1 = _pad2d(params["bu1"], 1, hd_p, f32)
    wu2 = _pad2d(params["wu2"], hd_p, od_p, bf16)
    bu2 = _pad2d(params["bu2"], 1, od_p, f32)

    # ---- Kernel 0: node_transform hoisted out of the edge loop ----
    node_emb = pl.pallas_call(
        _node_embed_kernel,
        out_shape=jax.ShapeDtypeStruct((n_p, hd_p), bf16),
        grid=(n_node_tiles,),
        in_specs=[
            pl.BlockSpec((TILE_N, nd_p), lambda i: (i, 0)),
            pl.BlockSpec((nd_p, hd_p), lambda i: (0, 0)),
            pl.BlockSpec((1, hd_p), lambda i: (0, 0)),
        ],
        out_specs=pl.BlockSpec((TILE_N, hd_p), lambda i: (i, 0)),
        compiler_params=pltpu.CompilerParams(dimension_semantics=("parallel",)),
    )(nf_p, wn, bn)

    # ---- Wrapper-side index plumbing (cheap XLA ops): sort by dst + gather ----
    dummy_dst = n_nodes
    src = jnp.pad(edge_indices[0].astype(jnp.int32), (0, e_p - n_edges),
                  constant_values=0)
    dst = jnp.pad(edge_indices[1].astype(jnp.int32), (0, e_p - n_edges),
                  constant_values=dummy_dst)
    ef_p = _pad2d(edge_features, e_p, ed_p, bf16)

    order = jnp.argsort(dst)            # CSR ordering (sorted by destination node)
    dst_s = dst[order]
    src_s = src[order]
    ef_s = ef_p[order]
    src_emb_s = node_emb[src_s]         # vectorized gather of node_emb[src] (no in-kernel loop)

    # Per-node-tile contiguous edge-chunk ranges (CSR row offsets at chunk granularity).
    bounds = jnp.arange(n_node_tiles + 1, dtype=jnp.int32) * TILE_N
    e_bounds = jnp.searchsorted(dst_s, bounds).astype(jnp.int32)
    chunk_start = (e_bounds[:-1] // TILE_E).astype(jnp.int32)
    chunk_end = ((e_bounds[1:] + TILE_E - 1) // TILE_E).astype(jnp.int32)
    num_chunks = jnp.maximum(chunk_end - chunk_start, 0).astype(jnp.int32)
    max_chunks = int(jnp.max(jnp.maximum(num_chunks, 1)))

    # dst replicated to 8 sublanes so its (8, TILE_E) block is tile-aligned.
    dst_rep = jnp.broadcast_to(dst_s[None, :], (8, e_p))

    def chunk_idx(i, j, cs, nc):
        return jnp.minimum(cs[i] + j, n_chunks - 1)     # clamp for gated-off steps

    edge_map = lambda i, j, cs, nc: (chunk_idx(i, j, cs, nc), 0)
    dst_map = lambda i, j, cs, nc: (0, chunk_idx(i, j, cs, nc))
    node_map = lambda i, j, cs, nc: (i, 0)
    const_map = lambda i, j, cs, nc: (0, 0)

    # ---- Kernel 1: fused messages + CSR segment reduction + update MLP ----
    out_padded = pl.pallas_call(
        _message_agg_update_kernel,
        out_shape=jax.ShapeDtypeStruct((n_p, od_p), f32),
        grid_spec=pltpu.PrefetchScalarGridSpec(
            num_scalar_prefetch=2,                   # chunk_start, num_chunks -> SMEM (tiny)
            grid=(n_node_tiles, max_chunks),
            in_specs=[
                pl.BlockSpec((TILE_E, hd_p), edge_map),    # gathered node_emb[src] (sorted)
                pl.BlockSpec((TILE_E, ed_p), edge_map),    # edge features (sorted)
                pl.BlockSpec((8, TILE_E), dst_map),        # dst (sorted, sublane-replicated)
                pl.BlockSpec((TILE_N, nd_p), node_map),    # raw node features (update MLP)
                pl.BlockSpec((ed_p, hd_p), const_map),     # we
                pl.BlockSpec((1, hd_p), const_map),        # be
                pl.BlockSpec((hd_p, hd_p), const_map),     # wm1a
                pl.BlockSpec((hd_p, hd_p), const_map),     # wm1b
                pl.BlockSpec((1, hd_p), const_map),        # bm1
                pl.BlockSpec((hd_p, od_p), const_map),     # wm2
                pl.BlockSpec((1, od_p), const_map),        # bm2
                pl.BlockSpec((nd_p, hd_p), const_map),     # wu1a
                pl.BlockSpec((od_p, hd_p), const_map),     # wu1b
                pl.BlockSpec((1, hd_p), const_map),        # bu1
                pl.BlockSpec((hd_p, od_p), const_map),     # wu2
                pl.BlockSpec((1, od_p), const_map),        # bu2
            ],
            out_specs=pl.BlockSpec((TILE_N, od_p), node_map),
            scratch_shapes=[pltpu.VMEM((TILE_N, od_p), f32)],
        ),
        compiler_params=pltpu.CompilerParams(
            # node tiles are independent -> megacore-shardable; chunk axis accumulates.
            dimension_semantics=("parallel", "arbitrary")),
    )(chunk_start, num_chunks,
      src_emb_s, ef_s, dst_rep, nf_p,
      we, be, wm1a, wm1b, bm1, wm2, bm2,
      wu1a, wu1b, bu1, wu2, bu2)

    return out_padded[:n_nodes, :out_dim]


def reference(node_features, edge_indices, edge_features, params):
    """Plain-JAX f32 reference mirroring the PyTorch forward exactly."""
    node_emb = node_features @ params["wn"] + params["bn"]
    edge_emb = edge_features @ params["we"] + params["be"]
    src, dst = edge_indices[0], edge_indices[1]
    msg_in = jnp.concatenate([node_emb[src], edge_emb], axis=-1)
    w1 = jnp.concatenate([params["wm1a"], params["wm1b"]], axis=0)
    h = jnp.maximum(msg_in @ w1 + params["bm1"], 0.0)
    messages = h @ params["wm2"] + params["bm2"]
    aggregated = jax.ops.segment_sum(messages, dst,
                                     num_segments=node_features.shape[0])
    upd_in = jnp.concatenate([node_features, aggregated], axis=-1)
    wu1 = jnp.concatenate([params["wu1a"], params["wu1b"]], axis=0)
    u = jnp.maximum(upd_in @ wu1 + params["bu1"], 0.0)
    return u @ params["wu2"] + params["bu2"]


if __name__ == "__main__":
    key = jax.random.PRNGKey(0)
    N, E = 16, 32
    node_dim, edge_dim, hidden_dim, out_dim = 8, 8, 32, 16

    ks = jax.random.split(key, 18)

    def init(k, shape, scale=0.1):
        return (scale * jax.random.normal(k, shape)).astype(jnp.float32)

    # Deterministic synthetic parameters (Linear weights stored as [in, out]).
    params = {
        "wn": init(ks[0], (node_dim, hidden_dim)),
        "bn": init(ks[1], (1, hidden_dim)),
        "we": init(ks[2], (edge_dim, hidden_dim)),
        "be": init(ks[3], (1, hidden_dim)),
        # message_mlp[0]: Linear(2*hidden, hidden) split at the concat boundary
        "wm1a": init(ks[4], (hidden_dim, hidden_dim)),   # acts on node_emb[src]
        "wm1b": init(ks[5], (hidden_dim, hidden_dim)),   # acts on edge_emb
        "bm1": init(ks[6], (1, hidden_dim)),
        "wm2": init(ks[7], (hidden_dim, out_dim)),
        "bm2": init(ks[8], (1, out_dim)),
        # update_mlp[0]: Linear(node_dim + out_dim, hidden) split at the concat boundary
        "wu1a": init(ks[9], (node_dim, hidden_dim)),     # acts on node_features
        "wu1b": init(ks[10], (out_dim, hidden_dim)),     # acts on aggregated
        "bu1": init(ks[11], (1, hidden_dim)),
        "wu2": init(ks[12], (hidden_dim, out_dim)),
        "bu2": init(ks[13], (1, out_dim)),
    }

    node_features = jax.random.normal(ks[14], (N, node_dim), dtype=jnp.float32)
    edge_features = jax.random.normal(ks[15], (E, edge_dim), dtype=jnp.float32)
    edge_indices = jax.random.randint(ks[16], (2, E), 0, N, dtype=jnp.int32)

    out = graph_conv_layer(node_features, edge_indices, edge_features, params)
    out = jax.block_until_ready(out)

    ref = reference(node_features, edge_indices, edge_features, params)
    assert out.shape == (N, out_dim)
    # bf16 MXU operands (per perf review) -> compare against f32 reference with
    # a bf16-appropriate tolerance.
    assert jnp.allclose(out, ref, atol=2e-2, rtol=2e-2), "mismatch vs reference"

    print("KERNEL_OK")
</pallas_src>

<mosaic_0001>
module attributes {stable_mosaic.version = 11 : i64} {
  func.func @_node_embed_kernel(%arg0: i32, %arg1: memref<256x128xbf16, #tpu.memory_space<vmem>>, %arg2: memref<128x128xbf16, #tpu.memory_space<vmem>>, %arg3: memref<1x128xf32, #tpu.memory_space<vmem>>, %arg4: memref<256x128xbf16, #tpu.memory_space<vmem>>) attributes {dimension_semantics = [#tpu.dimension_semantics<parallel>], iteration_bounds = array<i64: 1>, scalar_prefetch = 0 : i64, scratch_operands = 0 : i64, tpu.core_type = #tpu.core_type<tc>, window_params = [{transform_indices = @transform_0, window_bounds = array<i64: 256, 128>}, {pipeline_mode = #tpu.pipeline_mode<synchronous>, transform_indices = @transform_1, window_bounds = array<i64: 128, 128>}, {pipeline_mode = #tpu.pipeline_mode<synchronous>, transform_indices = @transform_2, window_bounds = array<i64: 1, 128>}, {transform_indices = @transform_3, window_bounds = array<i64: 256, 128>}]} {
    %c0 = arith.constant 0 : index
    %c0_0 = arith.constant 0 : index
    %0 = vector.load %arg1[%c0, %c0_0] : memref<256x128xbf16, #tpu.memory_space<vmem>>, vector<256x128xbf16>
    %c0_1 = arith.constant 0 : index
    %c0_2 = arith.constant 0 : index
    %1 = vector.load %arg2[%c0_1, %c0_2] : memref<128x128xbf16, #tpu.memory_space<vmem>>, vector<128x128xbf16>
    %cst = arith.constant dense<0.000000e+00> : vector<256x128xf32>
    %2 = tpu.matmul %0, %1, %cst {dimension_numbers = #tpu.dot_dimension_numbers<[1], [0], [0], [1], [0, 0, 1, 1], [], []>} : vector<256x128xbf16>, vector<128x128xbf16>, vector<256x128xf32> -> vector<256x128xf32>
    %c0_3 = arith.constant 0 : index
    %c0_4 = arith.constant 0 : index
    %3 = vector.load %arg3[%c0_3, %c0_4] : memref<1x128xf32, #tpu.memory_space<vmem>>, vector<1x128xf32>
    %4 = vector.broadcast %3 : vector<1x128xf32> to vector<256x128xf32>
    %5 = arith.addf %2, %4 : vector<256x128xf32>
    %6 = arith.truncf %5 : vector<256x128xf32> to vector<256x128xbf16>
    %c0_5 = arith.constant 0 : index
    %c0_6 = arith.constant 0 : index
    %7 = vector.load %arg4[%c0_5, %c0_6] : memref<256x128xbf16, #tpu.memory_space<vmem>>, vector<256x128xbf16>
    tpu.vector_store %arg4[%c0_5, %c0_6], %6 {strides = array<i32>} : memref<256x128xbf16, #tpu.memory_space<vmem>>, vector<256x128xbf16>,
    return
  }
  func.func @transform_0(%arg0: i32) -> (i32, i32) {
    %c0_i32 = arith.constant 0 : i32
    %c0_i32_0 = arith.constant 0 : i32
    return %arg0, %c0_i32 : i32, i32
  }
  func.func @transform_1(%arg0: i32) -> (i32, i32) {
    %c0_i32 = arith.constant 0 : i32
    %c0_i32_0 = arith.constant 0 : i32
    %c0_i32_1 = arith.constant 0 : i32
    return %c0_i32, %c0_i32_0 : i32, i32
  }
  func.func @transform_2(%arg0: i32) -> (i32, i32) {
    %c0_i32 = arith.constant 0 : i32
    %c0_i32_0 = arith.constant 0 : i32
    %c0_i32_1 = arith.constant 0 : i32
    return %c0_i32, %c0_i32_0 : i32, i32
  }
  func.func @transform_3(%arg0: i32) -> (i32, i32) {
    %c0_i32 = arith.constant 0 : i32
    %c0_i32_0 = arith.constant 0 : i32
    return %arg0, %c0_i32 : i32, i32
  }
}

</mosaic_0001>

<llo_original>
// kernel: tpu_custom_call.1
$region0: #{tpu_custom_call.1}
  #allocation0 [shape = 'u32[]', space=smem, size = 0x4, offset = 0x4, fixed_abs, tag = 'smem constant byte address 0x4 - core index']
  #allocation1 [shape = 'u32[144,128]{1,0:T(1,128)}', space=vmem, size = 0x12000, scoped, tag = 'internal scratch']
  %s0 = inlined_call_operand.hbm [shape: bf16[256,128], index: 0, kind: input, shape index: {}]
  %s1 = inlined_call_operand.hbm [shape: bf16[128,128], index: 1, kind: input, shape index: {}]
  %s2 = inlined_call_operand.vmem [shape: f32[1,128], index: 2, kind: input, shape index: {}]
  %s3 = inlined_call_operand.hbm [shape: bf16[256,128], index: 3, kind: output, shape index: {}]
  %s4 = sld [smem:[#allocation0]]
  $region30: #{tpu_custom_call.1} parent=0
    _
  %s6 = ssub.s32 1, %s4
  %s7 = scalar_select 0, %s6, %s4
  $region1: #{tpu_custom_call.1} parent=0
    #allocation2 [shape = 'u8[65536]{0}', space=vmem, size = 0x10000, scoped, tag = 'input window, operand 0, single buffered']
    #allocation3 [shape = 's32[1]{0}', space=sflag, size = 0x4, scoped, tag = 'scoped memory for tpu_custom_call.1']
    #allocation4 [shape = 's32[1]{0}', space=sflag, size = 0x4, scoped, tag = 'scoped memory for tpu_custom_call.1']
    #allocation5 [shape = 'u8[32768]{0}', space=vmem, size = 0x8000, scoped, tag = 'input window, operand 1, single buffered']
    #allocation6 [shape = 's32[1]{0}', space=sflag, size = 0x4, scoped, tag = 'scoped memory for tpu_custom_call.1']
    #allocation7 [shape = 'u8[65536]{0}', space=vmem, size = 0x10000, scoped, tag = 'output window, operand 0, single buffered']
    %8 = vsyncpa [#allocation3], 0
    %9 = vsyncpa [#allocation6], 0
    %10 = vsyncpa [#allocation4], 0
    // Predicated region
    $region2: #{tpu_custom_call.1} parent=1 // pred_check
      _
    $region3: #{tpu_custom_call.1} parent=1 // pred_check_branch
      %12 = sbr.rel (0) target = $region5
    $region4: #{tpu_custom_call.1} parent=1 // pred_region
      %s14 = ssub.s32 2048, 2048
      %15 = vsyncadd [#allocation3], %s14
      %s16 = sshll.u32 [#allocation2], 4
      %s17 = int_to_ptr.vmem [resolvable:$true] %s16
      %22 = dma.hbm_to_vmem [thread:$0]  %s0, 2048, %s17, [#allocation3], 64, 64, 4
    $region5: #{tpu_custom_call.1} parent=1 // pred_fallthru
      _
    // Predicated region
    $region6: #{tpu_custom_call.1} parent=1 // pred_check
      _
    $region7: #{tpu_custom_call.1} parent=1 // pred_check_branch
      %24 = sbr.rel (0) target = $region9
    $region8: #{tpu_custom_call.1} parent=1 // pred_region
      %s26 = ssub.s32 1024, 1024
      %27 = vsyncadd [#allocation6], %s26
      %s28 = sshll.u32 [#allocation5], 4
      %s29 = int_to_ptr.vmem [resolvable:$true] %s28
      %34 = dma.hbm_to_vmem [thread:$0]  %s1, 1024, %s29, [#allocation6], 64, 64, 4
    $region9: #{tpu_custom_call.1} parent=1 // pred_fallthru
      _
    // Predicated region
    $region10: #{tpu_custom_call.1} parent=1 // pred_check
      _
    $region11: #{tpu_custom_call.1} parent=1 // pred_check_branch
      %36 = sbr.rel (0) target = $region13
    $region12: #{tpu_custom_call.1} parent=1 // pred_region
      _
    $region13: #{tpu_custom_call.1} parent=1 // pred_fallthru
      _
    // Predicated region
    $region14: #{tpu_custom_call.1} parent=1 // pred_check
      _
    $region15: #{tpu_custom_call.1} parent=1 // pred_check_branch
      %38 = sbr.rel (0) target = $region17
    $region16: #{tpu_custom_call.1} parent=1 // pred_region
      %39 = dma.done [#allocation3], 2048
    $region17: #{tpu_custom_call.1} parent=1 // pred_fallthru
      _
    // Predicated region
    $region18: #{tpu_custom_call.1} parent=1 // pred_check
      _
    $region19: #{tpu_custom_call.1} parent=1 // pred_check_branch
      %41 = sbr.rel (0) target = $region21
    $region20: #{tpu_custom_call.1} parent=1 // pred_region
      %42 = dma.done [#allocation6], 1024
    $region21: #{tpu_custom_call.1} parent=1 // pred_fallthru
      _
    %v44 = vld [vmem:[#allocation2] sm:$0xf]
    %v45 = vld [vmem:[#allocation2 + $0x4] sm:$0xf]
    %v46 = vld [vmem:[#allocation2 + $0x8] sm:$0xf]
    %v47 = vld [vmem:[#allocation2 + $0xc] sm:$0xf]
    %v48 = vld [vmem:[#allocation2 + $0x10] sm:$0xf]
    %v49 = vld [vmem:[#allocation2 + $0x14] sm:$0xf]
    %v50 = vld [vmem:[#allocation2 + $0x18] sm:$0xf]
    %v51 = vld [vmem:[#allocation2 + $0x1c] sm:$0xf]
    %v52 = vld [vmem:[#allocation2 + $0x20] sm:$0xf]
    %v53 = vld [vmem:[#allocation2 + $0x24] sm:$0xf]
    %v54 = vld [vmem:[#allocation2 + $0x28] sm:$0xf]
    %v55 = vld [vmem:[#allocation2 + $0x2c] sm:$0xf]
    %v56 = vld [vmem:[#allocation2 + $0x30] sm:$0xf]
    %v57 = vld [vmem:[#allocation2 + $0x34] sm:$0xf]
    %v58 = vld [vmem:[#allocation2 + $0x38] sm:$0xf]
    %v59 = vld [vmem:[#allocation2 + $0x3c] sm:$0xf]
    %v60 = vld [vmem:[#allocation2 + $0x40] sm:$0xf]
    %v61 = vld [vmem:[#allocation2 + $0x44] sm:$0xf]
    %v62 = vld [vmem:[#allocation2 + $0x48] sm:$0xf]
    %v63 = vld [vmem:[#allocation2 + $0x4c] sm:$0xf]
    %v64 = vld [vmem:[#allocation2 + $0x50] sm:$0xf]
    %v65 = vld [vmem:[#allocation2 + $0x54] sm:$0xf]
    %v66 = vld [vmem:[#allocation2 + $0x58] sm:$0xf]
    %v67 = vld [vmem:[#allocation2 + $0x5c] sm:$0xf]
    %v68 = vld [vmem:[#allocation2 + $0x60] sm:$0xf]
    %v69 = vld [vmem:[#allocation2 + $0x64] sm:$0xf]
    %v70 = vld [vmem:[#allocation2 + $0x68] sm:$0xf]
    %v71 = vld [vmem:[#allocation2 + $0x6c] sm:$0xf]
    %v72 = vld [vmem:[#allocation2 + $0x70] sm:$0xf]
    %v73 = vld [vmem:[#allocation2 + $0x74] sm:$0xf]
    %v74 = vld [vmem:[#allocation2 + $0x78] sm:$0xf]
    %v75 = vld [vmem:[#allocation2 + $0x7c] sm:$0xf]
    %v76 = vld [vmem:[#allocation5] sm:$0xf]
    %v77 = vld [vmem:[#allocation5 + $0x4] sm:$0xf]
    %v78 = vld [vmem:[#allocation5 + $0x8] sm:$0xf]
    %v79 = vld [vmem:[#allocation5 + $0xc] sm:$0xf]
    %v80 = vld [vmem:[#allocation5 + $0x10] sm:$0xf]
    %v81 = vld [vmem:[#allocation5 + $0x14] sm:$0xf]
    %v82 = vld [vmem:[#allocation5 + $0x18] sm:$0xf]
    %v83 = vld [vmem:[#allocation5 + $0x1c] sm:$0xf]
    %v84 = vld [vmem:[#allocation5 + $0x20] sm:$0xf]
    %v85 = vld [vmem:[#allocation5 + $0x24] sm:$0xf]
    %v86 = vld [vmem:[#allocation5 + $0x28] sm:$0xf]
    %v87 = vld [vmem:[#allocation5 + $0x2c] sm:$0xf]
    %v88 = vld [vmem:[#allocation5 + $0x30] sm:$0xf]
    %v89 = vld [vmem:[#allocation5 + $0x34] sm:$0xf]
    %v90 = vld [vmem:[#allocation5 + $0x38] sm:$0xf]
    %v91 = vld [vmem:[#allocation5 + $0x3c] sm:$0xf]
    %v92 = vld [vmem:[%s2] sm:$0x1]
    %v94 = vlaneseq
    %v95 = vshrl.u32 %v94, 7
    %v96 = vsub.s32 0, %v95
    %v97 = vrot.slane %v92, %v96
    %v131 = vunpack.c.l.b16 %v44
    %v132 = vunpack.c.l.b16 %v45
    %v133 = vunpack.c.l.b16 %v46
    %v134 = vunpack.c.l.b16 %v47
    %v135 = vunpack.c.l.b16 %v48
    %v136 = vunpack.c.l.b16 %v49
    %v137 = vunpack.c.l.b16 %v50
    %v138 = vunpack.c.l.b16 %v51
    %v139 = vunpack.c.l.b16 %v52
    %v140 = vunpack.c.l.b16 %v53
    %v141 = vunpack.c.l.b16 %v54
    %v142 = vunpack.c.l.b16 %v55
    %v143 = vunpack.c.l.b16 %v56
    %v144 = vunpack.c.l.b16 %v57
    %v145 = vunpack.c.l.b16 %v58
    %v146 = vunpack.c.l.b16 %v59
    %v147 = vunpack.c.l.b16 %v60
    %v148 = vunpack.c.l.b16 %v61
    %v149 = vunpack.c.l.b16 %v62
    %v150 = vunpack.c.l.b16 %v63
    %v151 = vunpack.c.l.b16 %v64
    %v152 = vunpack.c.l.b16 %v65
    %v153 = vunpack.c.l.b16 %v66
    %v154 = vunpack.c.l.b16 %v67
    %v155 = vunpack.c.l.b16 %v68
    %v156 = vunpack.c.l.b16 %v69
    %v157 = vunpack.c.l.b16 %v70
    %v158 = vunpack.c.l.b16 %v71
    %v159 = vunpack.c.l.b16 %v72
    %v160 = vunpack.c.l.b16 %v73
    %v161 = vunpack.c.l.b16 %v74
    %v162 = vunpack.c.l.b16 %v75
    %v163 = vpack.c.b16 %v132, %v131
    %v164 = vpack.c.b16 %v134, %v133
    %v165 = vpack.c.b16 %v136, %v135
    %v166 = vpack.c.b16 %v138, %v137
    %v167 = vpack.c.b16 %v140, %v139
    %v168 = vpack.c.b16 %v142, %v141
    %v169 = vpack.c.b16 %v144, %v143
    %v170 = vpack.c.b16 %v146, %v145
    %v171 = vpack.c.b16 %v148, %v147
    %v172 = vpack.c.b16 %v150, %v149
    %v173 = vpack.c.b16 %v152, %v151
    %v174 = vpack.c.b16 %v154, %v153
    %v175 = vpack.c.b16 %v156, %v155
    %v176 = vpack.c.b16 %v158, %v157
    %v177 = vpack.c.b16 %v160, %v159
    %v178 = vpack.c.b16 %v162, %v161
    %v211 = vunpack.c.l.b16 %v76
    %v212 = vunpack.c.l.b16 %v77
    %v213 = vunpack.c.l.b16 %v78
    %v214 = vunpack.c.l.b16 %v79
    %v215 = vunpack.c.l.b16 %v80
    %v216 = vunpack.c.l.b16 %v81
    %v217 = vunpack.c.l.b16 %v82
    %v218 = vunpack.c.l.b16 %v83
    %v219 = vunpack.c.l.b16 %v84
    %v220 = vunpack.c.l.b16 %v85
    %v221 = vunpack.c.l.b16 %v86
    %v222 = vunpack.c.l.b16 %v87
    %v223 = vunpack.c.l.b16 %v88
    %v224 = vunpack.c.l.b16 %v89
    %v225 = vunpack.c.l.b16 %v90
    %v226 = vunpack.c.l.b16 %v91
    %v227 = vpack.c.b16 %v212, %v211
    %v228 = vpack.c.b16 %v214, %v213
    %v229 = vpack.c.b16 %v216, %v215
    %v230 = vpack.c.b16 %v218, %v217
    %v231 = vpack.c.b16 %v220, %v219
    %v232 = vpack.c.b16 %v222, %v221
    %v233 = vpack.c.b16 %v224, %v223
    %v234 = vpack.c.b16 %v226, %v225
    %243 = vmatprep.subr.bf16.mxu0 0
    %244 = vmatpush1.bf16.msra.mxu0 %v227
    %245 = vmatprep.subr.bf16.mxu0 0
    %246 = vmatpush1.bf16.msra.mxu0 %v228
    %247 = vmatprep.subr.bf16.mxu0 0
    %248 = vmatpush1.bf16.msra.mxu0 %v229
    %249 = vmatprep.subr.bf16.mxu0 0
    %250 = vmatpush1.bf16.msra.mxu0 %v230
    %251 = vmatprep.subr.bf16.mxu0 0
    %252 = vmatpush1.bf16.msra.mxu0 %v231
    %253 = vmatprep.subr.bf16.mxu0 0
    %254 = vmatpush1.bf16.msra.mxu0 %v232
    %255 = vmatprep.subr.bf16.mxu0 0
    %256 = vmatpush1.bf16.msra.mxu0 %v233
    %257 = vmatprep.subr.bf16.mxu0 0
    %258 = vmatpush1.bf16.msra.mxu0 %v234
    %259 = vmatprep.subr.bf16.mxu0 0
    %260 = vmatpush1.bf16.msra.mxu0 0
    %261 = vmatprep.subr.bf16.mxu0 0
    %262 = vmatpush1.bf16.msra.mxu0 0
    %263 = vmatprep.subr.bf16.mxu0 0
    %264 = vmatpush1.bf16.msra.mxu0 0
    %265 = vmatprep.subr.bf16.mxu0 0
    %266 = vmatpush1.bf16.msra.mxu0 0
    %267 = vmatprep.subr.bf16.mxu0 0
    %268 = vmatpush1.bf16.msra.mxu0 0
    %269 = vmatprep.subr.bf16.mxu0 0
    %270 = vmatpush1.bf16.msra.mxu0 0
    %271 = vmatprep.subr.bf16.mxu0 0
    %272 = vmatpush1.bf16.msra.mxu0 0
    %273 = vmatprep.subr.bf16.mxu0 0
    %274 = vmatpush1.bf16.msra.mxu0 0
    %275 = vmatprep.mubr.bf16.mxu0 0
    %276 = vmatmul.mubr.bf16.gmra.mrb[0].mxu0 %v163
    %v277 = vpop.f32.mrb[0].mxu0
    %v278 = vadd.f32 %v97, %v277
    %v279 = vpop.f32.mrb[0].mxu0
    %v280 = vpop.f32.mrb[0].mxu0
    %v281 = vadd.f32 %v97, %v280
    %v282 = vpop.f32.mrb[0].mxu0
    %283 = vmatprep.mubr.bf16.mxu0 0
    %284 = vmatmul.mubr.bf16.gmra.mrb[0].mxu0 %v164
    %v285 = vpop.f32.mrb[0].mxu0
    %v286 = vadd.f32 %v97, %v285
    %v287 = vpop.f32.mrb[0].mxu0
    %v288 = vpop.f32.mrb[0].mxu0
    %v289 = vadd.f32 %v97, %v288
    %v290 = vpop.f32.mrb[0].mxu0
    %291 = vmatprep.mubr.bf16.mxu0 0
    %292 = vmatmul.mubr.bf16.gmra.mrb[0].mxu0 %v165
    %v293 = vpop.f32.mrb[0].mxu0
    %v294 = vadd.f32 %v97, %v293
    %v295 = vpop.f32.mrb[0].mxu0
    %v296 = vpop.f32.mrb[0].mxu0
    %v297 = vadd.f32 %v97, %v296
    %v298 = vpop.f32.mrb[0].mxu0
    %299 = vmatprep.mubr.bf16.mxu0 0
    %300 = vmatmul.mubr.bf16.gmra.mrb[0].mxu0 %v166
    %v301 = vpop.f32.mrb[0].mxu0
    %v302 = vadd.f32 %v97, %v301
    %v303 = vpop.f32.mrb[0].mxu0
    %v304 = vpop.f32.mrb[0].mxu0
    %v305 = vadd.f32 %v97, %v304
    %v306 = vpop.f32.mrb[0].mxu0
    %307 = vmatprep.mubr.bf16.mxu0 0
    %308 = vmatmul.mubr.bf16.gmra.mrb[0].mxu0 %v167
    %v309 = vpop.f32.mrb[0].mxu0
    %v310 = vadd.f32 %v97, %v309
    %v311 = vpop.f32.mrb[0].mxu0
    %v312 = vpop.f32.mrb[0].mxu0
    %v313 = vadd.f32 %v97, %v312
    %v314 = vpop.f32.mrb[0].mxu0
    %315 = vmatprep.mubr.bf16.mxu0 0
    %316 = vmatmul.mubr.bf16.gmra.mrb[0].mxu0 %v168
    %v317 = vpop.f32.mrb[0].mxu0
    %v318 = vadd.f32 %v97, %v317
    %v319 = vpop.f32.mrb[0].mxu0
    %v320 = vpop.f32.mrb[0].mxu0
    %v321 = vadd.f32 %v97, %v320
    %v322 = vpop.f32.mrb[0].mxu0
    %323 = vmatprep.mubr.bf16.mxu0 0
    %324 = vmatmul.mubr.bf16.gmra.mrb[0].mxu0 %v169
    %v325 = vpop.f32.mrb[0].mxu0
    %v326 = vadd.f32 %v97, %v325
    %v327 = vpop.f32.mrb[0].mxu0
    %v328 = vpop.f32.mrb[0].mxu0
    %v329 = vadd.f32 %v97, %v328
    %v330 = vpop.f32.mrb[0].mxu0
    %331 = vmatprep.mubr.bf16.mxu0 0
    %332 = vmatmul.mubr.bf16.gmra.mrb[0].mxu0 %v170
    %v333 = vpop.f32.mrb[0].mxu0
    %v334 = vadd.f32 %v97, %v333
    %v335 = vpop.f32.mrb[0].mxu0
    %v336 = vpop.f32.mrb[0].mxu0
    %v337 = vadd.f32 %v97, %v336
    %v338 = vpop.f32.mrb[0].mxu0
    %339 = vmatprep.mubr.bf16.mxu0 0
    %340 = vmatmul.mubr.bf16.gmra.mrb[0].mxu0 %v171
    %v341 = vpop.f32.mrb[0].mxu0
    %v342 = vadd.f32 %v97, %v341
    %v343 = vpop.f32.mrb[0].mxu0
    %v344 = vpop.f32.mrb[0].mxu0
    %v345 = vadd.f32 %v97, %v344
    %v346 = vpop.f32.mrb[0].mxu0
    %347 = vmatprep.mubr.bf16.mxu0 0
    %348 = vmatmul.mubr.bf16.gmra.mrb[0].mxu0 %v172
    %v349 = vpop.f32.mrb[0].mxu0
    %v350 = vadd.f32 %v97, %v349
    %v351 = vpop.f32.mrb[0].mxu0
    %v352 = vpop.f32.mrb[0].mxu0
    %v353 = vadd.f32 %v97, %v352
    %v354 = vpop.f32.mrb[0].mxu0
    %355 = vmatprep.mubr.bf16.mxu0 0
    %356 = vmatmul.mubr.bf16.gmra.mrb[0].mxu0 %v173
    %v357 = vpop.f32.mrb[0].mxu0
    %v358 = vadd.f32 %v97, %v357
    %v359 = vpop.f32.mrb[0].mxu0
    %v360 = vpop.f32.mrb[0].mxu0
    %v361 = vadd.f32 %v97, %v360
    %v362 = vpop.f32.mrb[0].mxu0
    %363 = vmatprep.mubr.bf16.mxu0 0
    %364 = vmatmul.mubr.bf16.gmra.mrb[0].mxu0 %v174
    %v365 = vpop.f32.mrb[0].mxu0
    %v366 = vadd.f32 %v97, %v365
    %v367 = vpop.f32.mrb[0].mxu0
    %v368 = vpop.f32.mrb[0].mxu0
    %v369 = vadd.f32 %v97, %v368
    %v370 = vpop.f32.mrb[0].mxu0
    %371 = vmatprep.mubr.bf16.mxu0 0
    %372 = vmatmul.mubr.bf16.gmra.mrb[0].mxu0 %v175
    %v373 = vpop.f32.mrb[0].mxu0
    %v374 = vadd.f32 %v97, %v373
    %v375 = vpop.f32.mrb[0].mxu0
    %v376 = vpop.f32.mrb[0].mxu0
    %v377 = vadd.f32 %v97, %v376
    %v378 = vpop.f32.mrb[0].mxu0
    %379 = vmatprep.mubr.bf16.mxu0 0
    %380 = vmatmul.mubr.bf16.gmra.mrb[0].mxu0 %v176
    %v381 = vpop.f32.mrb[0].mxu0
    %v382 = vadd.f32 %v97, %v381
    %v383 = vpop.f32.mrb[0].mxu0
    %v384 = vpop.f32.mrb[0].mxu0
    %v385 = vadd.f32 %v97, %v384
    %v386 = vpop.f32.mrb[0].mxu0
    %387 = vmatprep.mubr.bf16.mxu0 0
    %388 = vmatmul.mubr.bf16.gmra.mrb[0].mxu0 %v177
    %v389 = vpop.f32.mrb[0].mxu0
    %v390 = vadd.f32 %v97, %v389
    %v391 = vpop.f32.mrb[0].mxu0
    %v392 = vpop.f32.mrb[0].mxu0
    %v393 = vadd.f32 %v97, %v392
    %v394 = vpop.f32.mrb[0].mxu0
    %395 = vmatprep.mubr.bf16.mxu0 0
    %396 = vmatmul.mubr.bf16.gmra.mrb[0].mxu0 %v178
    %v397 = vpop.f32.mrb[0].mxu0
    %v398 = vadd.f32 %v97, %v397
    %v399 = vpop.f32.mrb[0].mxu0
    %v400 = vpop.f32.mrb[0].mxu0
    %v401 = vadd.f32 %v97, %v400
    %v402 = vpop.f32.mrb[0].mxu0
    %403 = vdwg.mxu0
    %v404 = vpack.c.bf16 %v281, %v278
    %v405 = vpack.c.bf16 %v289, %v286
    %v406 = vpack.c.bf16 %v297, %v294
    %v407 = vpack.c.bf16 %v305, %v302
    %v408 = vpack.c.bf16 %v313, %v310
    %v409 = vpack.c.bf16 %v321, %v318
    %v410 = vpack.c.bf16 %v329, %v326
    %v411 = vpack.c.bf16 %v337, %v334
    %v412 = vpack.c.bf16 %v345, %v342
    %v413 = vpack.c.bf16 %v353, %v350
    %v414 = vpack.c.bf16 %v361, %v358
    %v415 = vpack.c.bf16 %v369, %v366
    %v416 = vpack.c.bf16 %v377, %v374
    %v417 = vpack.c.bf16 %v385, %v382
    %v418 = vpack.c.bf16 %v393, %v390
    %v419 = vpack.c.bf16 %v401, %v398
    %v436 = vunpack.c.l.b16 %v404
    %v437 = vunpack.c.h.b16 %v404
    %v438 = vunpack.c.l.b16 %v405
    %v439 = vunpack.c.h.b16 %v405
    %v440 = vunpack.c.l.b16 %v406
    %v441 = vunpack.c.h.b16 %v406
    %v442 = vunpack.c.l.b16 %v407
    %v443 = vunpack.c.h.b16 %v407
    %v444 = vunpack.c.l.b16 %v408
    %v445 = vunpack.c.h.b16 %v408
    %v446 = vunpack.c.l.b16 %v409
    %v447 = vunpack.c.h.b16 %v409
    %v448 = vunpack.c.l.b16 %v410
    %v449 = vunpack.c.h.b16 %v410
    %v450 = vunpack.c.l.b16 %v411
    %v451 = vunpack.c.h.b16 %v411
    %v452 = vunpack.c.l.b16 %v412
    %v453 = vunpack.c.h.b16 %v412
    %v454 = vunpack.c.l.b16 %v413
    %v455 = vunpack.c.h.b16 %v413
    %v456 = vunpack.c.l.b16 %v414
    %v457 = vunpack.c.h.b16 %v414
    %v458 = vunpack.c.l.b16 %v415
    %v459 = vunpack.c.h.b16 %v415
    %v460 = vunpack.c.l.b16 %v416
    %v461 = vunpack.c.h.b16 %v416
    %v462 = vunpack.c.l.b16 %v417
    %v463 = vunpack.c.h.b16 %v417
    %v464 = vunpack.c.l.b16 %v418
    %v465 = vunpack.c.h.b16 %v418
    %v466 = vunpack.c.l.b16 %v419
    %v467 = vunpack.c.h.b16 %v419
    %v468 = vpack.c.b16 %v436, %v436
    %v469 = vpack.c.b16 %v437, %v437
    %v470 = vpack.c.b16 %v438, %v438
    %v471 = vpack.c.b16 %v439, %v439
    %v472 = vpack.c.b16 %v440, %v440
    %v473 = vpack.c.b16 %v441, %v441
    %v474 = vpack.c.b16 %v442, %v442
    %v475 = vpack.c.b16 %v443, %v443
    %v476 = vpack.c.b16 %v444, %v444
    %v477 = vpack.c.b16 %v445, %v445
    %v478 = vpack.c.b16 %v446, %v446
    %v479 = vpack.c.b16 %v447, %v447
    %v480 = vpack.c.b16 %v448, %v448
    %v481 = vpack.c.b16 %v449, %v449
    %v482 = vpack.c.b16 %v450, %v450
    %v483 = vpack.c.b16 %v451, %v451
    %v484 = vpack.c.b16 %v452, %v452
    %v485 = vpack.c.b16 %v453, %v453
    %v486 = vpack.c.b16 %v454, %v454
    %v487 = vpack.c.b16 %v455, %v455
    %v488 = vpack.c.b16 %v456, %v456
    %v489 = vpack.c.b16 %v457, %v457
    %v490 = vpack.c.b16 %v458, %v458
    %v491 = vpack.c.b16 %v459, %v459
    %v492 = vpack.c.b16 %v460, %v460
    %v493 = vpack.c.b16 %v461, %v461
    %v494 = vpack.c.b16 %v462, %v462
    %v495 = vpack.c.b16 %v463, %v463
    %v496 = vpack.c.b16 %v464, %v464
    %v497 = vpack.c.b16 %v465, %v465
    %v498 = vpack.c.b16 %v466, %v466
    %v499 = vpack.c.b16 %v467, %v467
    %532 = vst [vmem:[#allocation7] sm:$0xf] %v468
    %533 = vst [vmem:[#allocation7 + $0x4] sm:$0xf] %v469
    %534 = vst [vmem:[#allocation7 + $0x8] sm:$0xf] %v470
    %535 = vst [vmem:[#allocation7 + $0xc] sm:$0xf] %v471
    %536 = vst [vmem:[#allocation7 + $0x10] sm:$0xf] %v472
    %537 = vst [vmem:[#allocation7 + $0x14] sm:$0xf] %v473
    %538 = vst [vmem:[#allocation7 + $0x18] sm:$0xf] %v474
    %539 = vst [vmem:[#allocation7 + $0x1c] sm:$0xf] %v475
    %540 = vst [vmem:[#allocation7 + $0x20] sm:$0xf] %v476
    %541 = vst [vmem:[#allocation7 + $0x24] sm:$0xf] %v477
    %542 = vst [vmem:[#allocation7 + $0x28] sm:$0xf] %v478
    %543 = vst [vmem:[#allocation7 + $0x2c] sm:$0xf] %v479
    %544 = vst [vmem:[#allocation7 + $0x30] sm:$0xf] %v480
    %545 = vst [vmem:[#allocation7 + $0x34] sm:$0xf] %v481
    %546 = vst [vmem:[#allocation7 + $0x38] sm:$0xf] %v482
    %547 = vst [vmem:[#allocation7 + $0x3c] sm:$0xf] %v483
    %548 = vst [vmem:[#allocation7 + $0x40] sm:$0xf] %v484
    %549 = vst [vmem:[#allocation7 + $0x44] sm:$0xf] %v485
    %550 = vst [vmem:[#allocation7 + $0x48] sm:$0xf] %v486
    %551 = vst [vmem:[#allocation7 + $0x4c] sm:$0xf] %v487
    %552 = vst [vmem:[#allocation7 + $0x50] sm:$0xf] %v488
    %553 = vst [vmem:[#allocation7 + $0x54] sm:$0xf] %v489
    %554 = vst [vmem:[#allocation7 + $0x58] sm:$0xf] %v490
    %555 = vst [vmem:[#allocation7 + $0x5c] sm:$0xf] %v491
    %556 = vst [vmem:[#allocation7 + $0x60] sm:$0xf] %v492
    %557 = vst [vmem:[#allocation7 + $0x64] sm:$0xf] %v493
    %558 = vst [vmem:[#allocation7 + $0x68] sm:$0xf] %v494
    %559 = vst [vmem:[#allocation7 + $0x6c] sm:$0xf] %v495
    %560 = vst [vmem:[#allocation7 + $0x70] sm:$0xf] %v496
    %561 = vst [vmem:[#allocation7 + $0x74] sm:$0xf] %v497
    %562 = vst [vmem:[#allocation7 + $0x78] sm:$0xf] %v498
    %563 = vst [vmem:[#allocation7 + $0x7c] sm:$0xf] %v499
    // Predicated region
    $region22: #{tpu_custom_call.1} parent=1 // pred_check
      _
    $region23: #{tpu_custom_call.1} parent=1 // pred_check_branch
      %565 = sbr.rel (0) target = $region25
    $region24: #{tpu_custom_call.1} parent=1 // pred_region
      %s567 = ssub.s32 2048, 2048
      %568 = vsyncadd [#allocation4], %s567
      %s569 = sshll.u32 [#allocation7], 4
      %s570 = int_to_ptr.vmem [resolvable:$true] %s569
      %575 = dma.vmem_to_hbm [thread:$0]  %s570, 2048, %s3, [#allocation4], 64, 64, 4
    $region25: #{tpu_custom_call.1} parent=1 // pred_fallthru
      _
    // Predicated region
    $region26: #{tpu_custom_call.1} parent=1 // pred_check
      _
    $region27: #{tpu_custom_call.1} parent=1 // pred_check_branch
      %577 = sbr.rel (0) target = $region29
    $region28: #{tpu_custom_call.1} parent=1 // pred_region
      %578 = dma.done [#allocation4], 2048
    $region29: #{tpu_custom_call.1} parent=1 // pred_fallthru
      _
    %579 = vsyncpa [#allocation3], 1
    %580 = vsyncpa [#allocation6], 1
    %581 = vsyncpa [#allocation4], 1

</llo_original>
